<compile_context>
chip_gen: v7x
topology: tpu7x:2x2x1
jax: 0.10.0
libtpu: 0.0.40
codegen_flags: <defaults>
</compile_context>

<pallas_src>
import numpy as np
import jax
import jax.numpy as jnp
from jax import lax
from jax.experimental import pallas as pl
from jax.experimental.pallas import tpu as pltpu

# ---- module constants (from nativeContrastLoss_class.__init__) ----------------
TEMPERATURE = 0.1
BASE_TEMPERATURE = 1.0
IGNORE_LABEL = 255
NUM_CLASSES = 17
DIM = 64
PIXEL_UPDATE_FREQ = 30
PIXEL_SIZE = PIXEL_UPDATE_FREQ * 5        # 150
MU = 0.99
N_VIEW = 100
EPS = 1e-12


def _round_up(x, m):
    return ((x + m - 1) // m) * m


# ================================ Pallas kernels ================================
def _l2_normalize_kernel(x_ref, o_ref):
    x = x_ref[...]
    ss = jnp.sum(x * x, axis=-1, keepdims=True)
    o_ref[...] = x * lax.rsqrt(jnp.maximum(ss, EPS * EPS))


def l2_normalize(x, tile_rows=256):
    """Row-wise L2 normalization (torch.nn.functional.normalize, eps=1e-12)."""
    R, D = x.shape
    r_pad = _round_up(max(R, 1), tile_rows)
    xp = jnp.pad(x, ((0, r_pad - R), (0, 0)))
    out = pl.pallas_call(
        _l2_normalize_kernel,
        out_shape=jax.ShapeDtypeStruct((r_pad, D), x.dtype),
        grid=(r_pad // tile_rows,),
        in_specs=[pl.BlockSpec((tile_rows, D), lambda i: (i, 0))],
        out_specs=pl.BlockSpec((tile_rows, D), lambda i: (i, 0)),
        compiler_params=pltpu.CompilerParams(dimension_semantics=("parallel",)),
    )(xp)
    return out[:R]


def _contrast_loss_kernel(x_ref, ycol_ref, yrow_ref, xt_ref, xqt_ref, yqrow_ref,
                          cct_ref, ycrow_ref, out_ref):
    f32 = jnp.float32
    inv_t = 1.0 / TEMPERATURE

    tile_n = x_ref.shape[0]
    row_off = pl.program_id(0) * tile_n

    x = x_ref[...]                           # (T, D)  bf16, L2-normalized anchors
    ycol = ycol_ref[...]                     # (T, 1)  f32 labels (-1 = pad row)
    yrow = yrow_ref[...]                     # (1, N)  f32 labels (-1 = pad col)
    n = yrow.shape[1]

    row_valid = ycol >= 0.0                  # (T, 1) bool
    col_valid = (yrow >= 0.0).astype(f32)    # (1, N)

    # ---------------- _ppc_contrastive_v1 ----------------
    eq_aa = (ycol == yrow).astype(f32)                               # (T, N)
    mask = eq_aa * col_valid

    # diagonal (self) mask for this row tile
    col_ids = lax.broadcasted_iota(jnp.int32, (tile_n, n), 1)
    row_ids = lax.broadcasted_iota(jnp.int32, (tile_n, n), 0) + row_off
    not_diag = (col_ids != row_ids).astype(f32)

    adc = jnp.dot(x, xt_ref[...], preferred_element_type=f32) * inv_t
    # row max of the normalized self-similarity is the diagonal == 1/T
    logits = adc - inv_t

    neg_mask_raw = (1.0 - eq_aa) * col_valid
    mask_pos = mask * not_diag

    yqrow = yqrow_ref[...]                   # (1, Q)  (-2 = pad col)
    q_valid_b = yqrow >= 0.0
    q_valid = q_valid_b.astype(f32)
    neg_mask_q = (1.0 - (ycol == yqrow).astype(f32)) * q_valid
    adc_q = jnp.dot(x, xqt_ref[...], preferred_element_type=f32) * inv_t
    m_q = jnp.max(jnp.where(q_valid_b, adc_q, -1e30), axis=1, keepdims=True)
    logits_q = adc_q - m_q

    exp_logits = jnp.exp(logits)
    neg_raw = jnp.sum(exp_logits * neg_mask_raw, axis=1, keepdims=True)
    neg_q = jnp.sum(jnp.exp(logits_q) * neg_mask_q, axis=1, keepdims=True)
    log_prob = logits - jnp.log(exp_logits + neg_q + neg_raw)

    mask_sum = jnp.sum(mask_pos, axis=1, keepdims=True)              # (T, 1)
    pos_sum = jnp.sum(mask_pos * log_prob, axis=1, keepdims=True)    # (T, 1)
    has_pos = mask_sum > 0.0
    per_anchor = jnp.where(has_pos, pos_sum / jnp.where(has_pos, mask_sum, 1.0), 0.0)
    s_ppc = jnp.sum(per_anchor)
    n_pos = jnp.sum(has_pos.astype(f32))

    # ---------------- _pcc_contrastive ----------------
    ycrow = ycrow_ref[...]                   # (1, C)  (-2 = pad col)
    c_valid_b = ycrow >= 0.0
    c_valid = c_valid_b.astype(f32)
    eq_c = (ycol == ycrow).astype(f32) * c_valid
    neg_mask_c = (1.0 - (ycol == ycrow).astype(f32)) * c_valid
    adc_c = jnp.dot(x, cct_ref[...], preferred_element_type=f32) * inv_t
    m_c = jnp.max(jnp.where(c_valid_b, adc_c, -1e30), axis=1, keepdims=True)
    logits_c = adc_c - m_c
    exp_c = jnp.exp(logits_c)
    neg_c = jnp.sum(exp_c * neg_mask_c, axis=1, keepdims=True)
    log_prob_c = logits_c - jnp.log(exp_c + neg_c)

    csum = jnp.sum(eq_c, axis=1, keepdims=True)
    cnum = jnp.sum(eq_c * log_prob_c, axis=1, keepdims=True)
    mlpp_c = jnp.where(row_valid, cnum / jnp.where(row_valid, jnp.maximum(csum, 1.0), 1.0), 0.0)
    s_pcc = jnp.sum(mlpp_c)
    n_rows = jnp.sum(row_valid.astype(f32))

    # lane-dense per-tile partials: [sum_per_anchor, n_has_pos, sum_mlpp_c, n_valid_rows]
    sub = lax.broadcasted_iota(jnp.int32, (1, 8, 128), 1)
    lane = lax.broadcasted_iota(jnp.int32, (1, 8, 128), 2)
    first = sub == 0
    out_ref[...] = (jnp.where(first & (lane == 0), s_ppc, 0.0)
                    + jnp.where(first & (lane == 1), n_pos, 0.0)
                    + jnp.where(first & (lane == 2), s_pcc, 0.0)
                    + jnp.where(first & (lane == 3), n_rows, 0.0))


def contrast_losses(X, y, Xq, yq, centers, yc, tile_n=128):
    """Row-tiled Pallas kernel for _ppc_contrastive_v1 + _pcc_contrastive."""
    N, D = X.shape
    Q = Xq.shape[0]
    C = centers.shape[0]
    n_pad = _round_up(N, tile_n)
    q_pad = _round_up(Q, 128)
    c_pad = _round_up(C, 128)

    def pad_rows(a, new_rows, fill=0.0):
        pads = [(0, new_rows - a.shape[0])] + [(0, 0)] * (a.ndim - 1)
        return jnp.pad(a, pads, constant_values=fill)

    Xp = pad_rows(X.astype(jnp.float32), n_pad).astype(jnp.bfloat16)        # (N_pad, D)
    yp = pad_rows(y.astype(jnp.float32).reshape(-1), n_pad, fill=-1.0)      # (N_pad,)
    Xqp = pad_rows(Xq.astype(jnp.float32), q_pad).astype(jnp.bfloat16)      # (Q_pad, D)
    yqp = pad_rows(yq.astype(jnp.float32).reshape(-1), q_pad, fill=-2.0)
    ccp = pad_rows(centers.astype(jnp.float32), c_pad).astype(jnp.bfloat16)
    ycp = pad_rows(yc.astype(jnp.float32).reshape(-1), c_pad, fill=-2.0)

    ycol = yp.reshape(n_pad, 1)
    yrow = yp.reshape(1, n_pad)
    yqrow = yqp.reshape(1, q_pad)
    ycrow = ycp.reshape(1, c_pad)
    xt = Xp.T                                 # (D, N_pad)  lane-dense RHS layouts
    xqt = Xqp.T                               # (D, Q_pad)
    cct = ccp.T                               # (D, C_pad)

    num_tiles = n_pad // tile_n

    parts = pl.pallas_call(
        _contrast_loss_kernel,
        out_shape=jax.ShapeDtypeStruct((num_tiles, 8, 128), jnp.float32),
        grid=(num_tiles,),
        in_specs=[
            pl.BlockSpec((tile_n, D), lambda i: (i, 0)),        # X tile (LHS)
            pl.BlockSpec((tile_n, 1), lambda i: (i, 0)),        # anchor labels (col)
            pl.BlockSpec((1, n_pad), lambda i: (0, 0)),         # anchor labels (row), resident
            pl.BlockSpec((D, n_pad), lambda i: (0, 0)),         # X^T, resident
            pl.BlockSpec((D, q_pad), lambda i: (0, 0)),         # queue^T, resident
            pl.BlockSpec((1, q_pad), lambda i: (0, 0)),         # queue labels, resident
            pl.BlockSpec((D, c_pad), lambda i: (0, 0)),         # centers^T, resident
            pl.BlockSpec((1, c_pad), lambda i: (0, 0)),         # center labels, resident
        ],
        out_specs=pl.BlockSpec((1, 8, 128), lambda i: (i, 0, 0)),
        compiler_params=pltpu.CompilerParams(dimension_semantics=("parallel",)),
    )(Xp, ycol, yrow, xt, xqt, yqrow, cct, ycrow)

    s_ppc = jnp.sum(parts[:, 0, 0])
    n_pos = jnp.sum(parts[:, 0, 1])
    s_pcc = jnp.sum(parts[:, 0, 2])
    n_rows = jnp.sum(parts[:, 0, 3])

    scale = -(TEMPERATURE / BASE_TEMPERATURE)
    ppc = scale * s_ppc / jnp.maximum(n_pos, 1.0)
    pcc = scale * s_pcc / jnp.maximum(n_rows, 1.0)
    loss = pcc * 10.0 + ppc
    return loss, pcc, ppc


# ============================ host-side glue (dynamic) ==========================
# TODO(synk): _assigning_subclass_labels_cur / _queue_operations use dynamic shapes,
#             quantile thresholds and randperm -> kept as deterministic host-side glue.
def assign_subclass_labels_cur(X, y_hat, y, cur, rng):
    """numpy mirror of _assigning_subclass_labels_cur (dynamic shapes / randperm)."""
    X_list, y_list = [], []
    B = X.shape[0]
    for ii in range(B):
        this_y_hat, this_x, this_cur = y_hat[ii], X[ii], cur[ii]
        this_classes = [c for c in np.unique(this_y_hat) if c != IGNORE_LABEL]
        for cls_id in this_classes:
            class_indices = np.nonzero(this_y_hat == cls_id)[0]
            class_cur = this_cur[class_indices]
            thr = np.quantile(class_cur, 0.95)
            hard = class_indices[class_cur >= thr]
            easy = class_indices[class_cur <= thr]
            nh_all, ne_all = len(hard), len(easy)
            if nh_all >= N_VIEW / 2 and ne_all >= N_VIEW / 2:
                nh, ne = N_VIEW // 2, N_VIEW - N_VIEW // 2
            elif nh_all >= N_VIEW / 2:
                ne = ne_all
                nh = N_VIEW - ne
            elif ne_all >= N_VIEW / 2:
                nh = nh_all
                ne = N_VIEW - nh
            else:
                nh, ne = nh_all, ne_all
            hard = hard[rng.permutation(nh_all)[:nh]]
            easy = easy[rng.permutation(ne_all)[:ne]]
            indices = np.concatenate([hard, easy], axis=0)
            X_list.append(this_x[indices])
            y_list.append(this_y_hat[indices])
    if not X_list:
        return None, None
    return (np.concatenate(X_list, 0).astype(np.float32),
            np.concatenate(y_list, 0).astype(np.float32))


def queue_operations(point_queue, ptrs, feats, labels, rng):
    """numpy mirror of _queue_operations (ring-buffer update, randperm)."""
    this_feat = feats.reshape(DIM, -1)      # torch .view(dim, -1): row-major reinterpret
    this_label = labels.reshape(-1)
    for lb in np.unique(this_label):
        lb_i = int(lb)
        idxs = np.nonzero(this_label == lb)[0]
        perm = rng.permutation(len(idxs))
        cnt = min(len(idxs), PIXEL_UPDATE_FREQ)
        feat = this_feat[:, idxs[perm[:cnt]]].T
        feat = feat / np.maximum(np.linalg.norm(feat, axis=1, keepdims=True), EPS)
        ptr = int(ptrs[lb_i])
        if ptr + cnt > PIXEL_SIZE:
            point_queue[lb_i, -cnt:, :] = feat
            ptrs[lb_i] = 0
        else:
            point_queue[lb_i, ptr:ptr + cnt, :] = feat
            ptrs[lb_i] = (ptr + cnt) % PIXEL_SIZE
    return point_queue, ptrs


def reference_losses(X, y, Xq, yq, centers, yc):
    """Plain-JAX f32 reference of the two contrastive losses (for validation)."""
    T, bT = TEMPERATURE, BASE_TEMPERATURE
    dn = (((1,), (1,)), ((), ()))
    prec = lax.Precision.HIGHEST
    ycol = y.reshape(-1, 1)
    N = X.shape[0]

    mask = (ycol == y.reshape(1, -1)).astype(jnp.float32)
    adc = lax.dot_general(X, X, dn, precision=prec) / T
    logits = adc - jnp.max(adc, axis=1, keepdims=True)
    logits_mask = 1.0 - jnp.eye(N, dtype=jnp.float32)
    neg_mask_raw = 1.0 - mask
    mask_pos = mask * logits_mask
    neg_mask_q = 1.0 - (ycol == yq.reshape(1, -1)).astype(jnp.float32)
    adc_neg = lax.dot_general(X, Xq, dn, precision=prec) / T
    logits_neg = adc_neg - jnp.max(adc_neg, axis=1, keepdims=True)
    neg_logits_raw = jnp.sum(jnp.exp(logits) * neg_mask_raw, axis=1, keepdims=True)
    neg_logits = jnp.sum(jnp.exp(logits_neg) * neg_mask_q, axis=1, keepdims=True)
    log_prob = logits - jnp.log(jnp.exp(logits) + neg_logits + neg_logits_raw)
    msum = mask_pos.sum(1)
    valid = msum != 0
    mlpp = jnp.where(valid, (mask_pos * log_prob).sum(1) / jnp.where(valid, msum, 1.0), 0.0)
    ppc = -(T / bT) * jnp.sum(mlpp) / jnp.maximum(jnp.sum(valid.astype(jnp.float32)), 1.0)

    mask_c = (ycol == yc.reshape(1, -1)).astype(jnp.float32)
    adc_c = lax.dot_general(X, centers, dn, precision=prec) / T
    logits_c = adc_c - jnp.max(adc_c, axis=1, keepdims=True)
    neg_c = jnp.sum(jnp.exp(logits_c) * (1.0 - mask_c), axis=1, keepdims=True)
    log_prob_c = logits_c - jnp.log(jnp.exp(logits_c) + neg_c)
    mlpp_c = (mask_c * log_prob_c).sum(1) / mask_c.sum(1)
    pcc = -(T / bT) * jnp.mean(mlpp_c)
    return pcc * 10.0 + ppc, pcc, ppc


# ==================================== main ======================================
if __name__ == "__main__":
    key = jax.random.PRNGKey(0)
    k1, k2, k3, k4, k5 = jax.random.split(key, 5)

    B, P = 2, 256                                   # bs, p_num (small example)
    feat_s = jax.random.normal(k1, (B, DIM, P), dtype=jnp.float32)   # (bs, f_dim, p_num)

    # label_s (used as y_hat in the sampler); each image has 2 classes with >=100 pixels
    label_np = np.zeros((B, P), dtype=np.int64)
    label_np[0, :P // 2] = 1
    label_np[0, P // 2:] = 2
    label_np[1, :P // 2] = 3
    label_np[1, P // 2:] = 4
    pred_np = np.array(jax.random.randint(k2, (B, P), 0, NUM_CLASSES), dtype=np.int64)
    cur_np = np.array(jax.random.uniform(k3, (B, P), dtype=jnp.float32))

    # deterministic "module state" init (randn -> L2-normalize), mirrors __init__
    cluster_center = l2_normalize(jax.random.normal(k4, (NUM_CLASSES, DIM), dtype=jnp.float32))
    point_queue = l2_normalize(
        jax.random.normal(k5, (NUM_CLASSES * PIXEL_SIZE, DIM), dtype=jnp.float32)
    ).reshape(NUM_CLASSES, PIXEL_SIZE, DIM)
    point_queue_ptr = np.zeros(NUM_CLASSES, dtype=np.int64)

    # ---- forward ----
    # permute (bs, f_dim, p_num) -> (bs, p_num, f_dim), L2-normalize feature dim (Pallas kernel)
    feat_perm = jnp.transpose(feat_s, (0, 2, 1)).reshape(B * P, DIM)
    feat_norm = l2_normalize(feat_perm)
    feat_norm_np = np.asarray(feat_norm).reshape(B, P, DIM)

    rng = np.random.default_rng(0)
    X_np, y_np = assign_subclass_labels_cur(feat_norm_np, label_np, pred_np, cur_np, rng)
    if X_np is None:
        loss = jnp.float32(0.0)
        jax.block_until_ready(loss)
    else:
        X = jnp.asarray(X_np)
        yl = jnp.asarray(y_np)

        # _sample_negative(): flatten the point queue
        Xq = point_queue.reshape(NUM_CLASSES * PIXEL_SIZE, DIM)
        yq = jnp.repeat(jnp.arange(NUM_CLASSES, dtype=jnp.float32), PIXEL_SIZE)
        yc = jnp.arange(NUM_CLASSES, dtype=jnp.float32)

        loss, pcc_loss, ppc_loss = contrast_losses(X, yl, Xq, yq, cluster_center, yc)
        jax.block_until_ready(loss)

        # validate against a plain-JAX f32 reference (bf16 operands inside the kernel)
        ref_loss, ref_pcc, ref_ppc = reference_losses(X, yl, Xq, yq, cluster_center, yc)
        np.testing.assert_allclose(np.asarray(loss), np.asarray(ref_loss), rtol=2e-2, atol=2e-2)
        np.testing.assert_allclose(np.asarray(pcc_loss), np.asarray(ref_pcc), rtol=2e-2, atol=2e-2)
        np.testing.assert_allclose(np.asarray(ppc_loss), np.asarray(ref_ppc), rtol=2e-2, atol=2e-2)
        assert np.isfinite(np.asarray(loss))

        # ---- stateful updates (host-side, dynamic shapes / randperm) ----
        pq_np = np.asarray(point_queue).copy()
        pq_np, point_queue_ptr = queue_operations(pq_np, point_queue_ptr, X_np,
                                                  y_np.astype(np.int64), rng)
        point_queue = jnp.asarray(pq_np)

        cc_np = np.asarray(cluster_center).copy()
        new_cc = cc_np.copy()
        for cls_id in range(NUM_CLASSES):
            sel = (y_np == cls_id)
            if sel.any():
                new_cc[cls_id] = X_np[sel].mean(0)
        cc_np = cc_np * MU + new_cc * (1.0 - MU)
        cc_np = cc_np / np.maximum(np.linalg.norm(cc_np, axis=1, keepdims=True), EPS)
        cluster_center = jnp.asarray(cc_np)

    print("KERNEL_OK")
</pallas_src>

<mosaic_0001>
module attributes {stable_mosaic.version = 11 : i64} {
  func.func @_l2_normalize_kernel(%arg0: i32, %arg1: memref<256x64xf32, #tpu.memory_space<vmem>>, %arg2: memref<256x64xf32, #tpu.memory_space<vmem>>) attributes {dimension_semantics = [#tpu.dimension_semantics<parallel>], iteration_bounds = array<i64: 1>, scalar_prefetch = 0 : i64, scratch_operands = 0 : i64, tpu.core_type = #tpu.core_type<tc>, window_params = [{transform_indices = @transform_0, window_bounds = array<i64: 256, 64>}, {transform_indices = @transform_1, window_bounds = array<i64: 256, 64>}]} {
    %c0 = arith.constant 0 : index
    %c0_0 = arith.constant 0 : index
    %0 = vector.load %arg1[%c0, %c0_0] : memref<256x64xf32, #tpu.memory_space<vmem>>, vector<256x64xf32>
    %1 = arith.mulf %0, %0 : vector<256x64xf32>
    %cst = arith.constant dense<0.000000e+00> : vector<256xf32>
    %2 = vector.multi_reduction <add>, %1, %cst [1] : vector<256x64xf32> to vector<256xf32>
    %3 = vector.shape_cast %2 : vector<256xf32> to vector<256x1xf32>
    %cst_1 = arith.constant 1.000000e-24 : f32
    %4 = vector.broadcast %cst_1 : f32 to vector<256x1xf32>
    %5 = arith.maximumf %3, %4 : vector<256x1xf32>
    %6 = math.rsqrt %5 : vector<256x1xf32>
    %7 = vector.broadcast %6 : vector<256x1xf32> to vector<256x64xf32>
    %8 = arith.mulf %0, %7 : vector<256x64xf32>
    %c0_2 = arith.constant 0 : index
    %c0_3 = arith.constant 0 : index
    %9 = vector.load %arg2[%c0_2, %c0_3] : memref<256x64xf32, #tpu.memory_space<vmem>>, vector<256x64xf32>
    tpu.vector_store %arg2[%c0_2, %c0_3], %8 {strides = array<i32>} : memref<256x64xf32, #tpu.memory_space<vmem>>, vector<256x64xf32>,
    return
  }
  func.func @transform_0(%arg0: i32) -> (i32, i32) {
    %c0_i32 = arith.constant 0 : i32
    %c0_i32_0 = arith.constant 0 : i32
    return %arg0, %c0_i32 : i32, i32
  }
  func.func @transform_1(%arg0: i32) -> (i32, i32) {
    %c0_i32 = arith.constant 0 : i32
    %c0_i32_0 = arith.constant 0 : i32
    return %arg0, %c0_i32 : i32, i32
  }
}

</mosaic_0001>

<llo_original>
// kernel: tpu_custom_call.1
$region0: #{tpu_custom_call.1}
  #allocation0 [shape = 'u32[]', space=smem, size = 0x4, offset = 0x4, fixed_abs, tag = 'smem constant byte address 0x4 - core index']
  #allocation1 [shape = 'u32[144,128]{1,0:T(1,128)}', space=vmem, size = 0x12000, scoped, tag = 'internal scratch']
  %s0 = inlined_call_operand.vmem [shape: f32[256,64], index: 0, kind: input, shape index: {}]
  %s1 = inlined_call_operand.vmem [shape: f32[256,64], index: 1, kind: output, shape index: {}]
  %s2 = sld [smem:[#allocation0]]
  $region14: #{tpu_custom_call.1} parent=0
    _
  %s4 = ssub.s32 1, %s2
  %s5 = scalar_select 0, %s4, %s2
  // Predicated region
  $region2: #{tpu_custom_call.1} parent=0 // pred_check
    _
  $region3: #{tpu_custom_call.1} parent=0 // pred_check_branch
    %7 = sbr.rel (0) target = $region5
  $region4: #{tpu_custom_call.1} parent=0 // pred_region
    _
  $region5: #{tpu_custom_call.1} parent=0 // pred_fallthru
    _
  %v8 = vld [vmem:[%s0] sm:$0xff]
  %v9 = vld [vmem:[%s0 + $0x8] sm:$0xff]
  %v10 = vld [vmem:[%s0 + $0x10] sm:$0xff]
  %v11 = vld [vmem:[%s0 + $0x18] sm:$0xff]
  %v12 = vld [vmem:[%s0 + $0x20] sm:$0xff]
  %v13 = vld [vmem:[%s0 + $0x28] sm:$0xff]
  %v14 = vld [vmem:[%s0 + $0x30] sm:$0xff]
  %v15 = vld [vmem:[%s0 + $0x38] sm:$0xff]
  %v16 = vld [vmem:[%s0 + $0x40] sm:$0xff]
  %v17 = vld [vmem:[%s0 + $0x48] sm:$0xff]
  %v18 = vld [vmem:[%s0 + $0x50] sm:$0xff]
  %v19 = vld [vmem:[%s0 + $0x58] sm:$0xff]
  %v20 = vld [vmem:[%s0 + $0x60] sm:$0xff]
  %v21 = vld [vmem:[%s0 + $0x68] sm:$0xff]
  %v22 = vld [vmem:[%s0 + $0x70] sm:$0xff]
  %v23 = vld [vmem:[%s0 + $0x78] sm:$0xff]
  %v24 = vld [vmem:[%s0 + $0x80] sm:$0xff]
  %v25 = vld [vmem:[%s0 + $0x88] sm:$0xff]
  %v26 = vld [vmem:[%s0 + $0x90] sm:$0xff]
  %v27 = vld [vmem:[%s0 + $0x98] sm:$0xff]
  %v28 = vld [vmem:[%s0 + $0xa0] sm:$0xff]
  %v29 = vld [vmem:[%s0 + $0xa8] sm:$0xff]
  %v30 = vld [vmem:[%s0 + $0xb0] sm:$0xff]
  %v31 = vld [vmem:[%s0 + $0xb8] sm:$0xff]
  %v32 = vld [vmem:[%s0 + $0xc0] sm:$0xff]
  %v33 = vld [vmem:[%s0 + $0xc8] sm:$0xff]
  %v34 = vld [vmem:[%s0 + $0xd0] sm:$0xff]
  %v35 = vld [vmem:[%s0 + $0xd8] sm:$0xff]
  %v36 = vld [vmem:[%s0 + $0xe0] sm:$0xff]
  %v37 = vld [vmem:[%s0 + $0xe8] sm:$0xff]
  %v38 = vld [vmem:[%s0 + $0xf0] sm:$0xff]
  %v39 = vld [vmem:[%s0 + $0xf8] sm:$0xff]
  %v40 = vmul.f32 %v8, %v8
  %v41 = vmul.f32 %v9, %v9
  %v42 = vmul.f32 %v10, %v10
  %v43 = vmul.f32 %v11, %v11
  %v44 = vmul.f32 %v12, %v12
  %v45 = vmul.f32 %v13, %v13
  %v46 = vmul.f32 %v14, %v14
  %v47 = vmul.f32 %v15, %v15
  %v48 = vmul.f32 %v16, %v16
  %v49 = vmul.f32 %v17, %v17
  %v50 = vmul.f32 %v18, %v18
  %v51 = vmul.f32 %v19, %v19
  %v52 = vmul.f32 %v20, %v20
  %v53 = vmul.f32 %v21, %v21
  %v54 = vmul.f32 %v22, %v22
  %v55 = vmul.f32 %v23, %v23
  %v56 = vmul.f32 %v24, %v24
  %v57 = vmul.f32 %v25, %v25
  %v58 = vmul.f32 %v26, %v26
  %v59 = vmul.f32 %v27, %v27
  %v60 = vmul.f32 %v28, %v28
  %v61 = vmul.f32 %v29, %v29
  %v62 = vmul.f32 %v30, %v30
  %v63 = vmul.f32 %v31, %v31
  %v64 = vmul.f32 %v32, %v32
  %v65 = vmul.f32 %v33, %v33
  %v66 = vmul.f32 %v34, %v34
  %v67 = vmul.f32 %v35, %v35
  %v68 = vmul.f32 %v36, %v36
  %v69 = vmul.f32 %v37, %v37
  %v70 = vmul.f32 %v38, %v38
  %v71 = vmul.f32 %v39, %v39
  %vm72 = vcmask 523264
  %v73 = vsel %vm72, %v40, 0.0
  %74 = vadd.xlane.f32.xlu0 %v73
  %v75 = vpop.xlane.xlu0 %74
  %v76 = vsel %vm72, %v41, 0.0
  %77 = vadd.xlane.f32.xlu0 %v76
  %v78 = vpop.xlane.xlu0 %77
  %v79 = vsel %vm72, %v42, 0.0
  %80 = vadd.xlane.f32.xlu0 %v79
  %v81 = vpop.xlane.xlu0 %80
  %v82 = vsel %vm72, %v43, 0.0
  %83 = vadd.xlane.f32.xlu0 %v82
  %v84 = vpop.xlane.xlu0 %83
  %v85 = vsel %vm72, %v44, 0.0
  %86 = vadd.xlane.f32.xlu0 %v85
  %v87 = vpop.xlane.xlu0 %86
  %v88 = vsel %vm72, %v45, 0.0
  %89 = vadd.xlane.f32.xlu0 %v88
  %v90 = vpop.xlane.xlu0 %89
  %v91 = vsel %vm72, %v46, 0.0
  %92 = vadd.xlane.f32.xlu0 %v91
  %v93 = vpop.xlane.xlu0 %92
  %v94 = vsel %vm72, %v47, 0.0
  %95 = vadd.xlane.f32.xlu0 %v94
  %v96 = vpop.xlane.xlu0 %95
  %v97 = vsel %vm72, %v48, 0.0
  %98 = vadd.xlane.f32.xlu0 %v97
  %v99 = vpop.xlane.xlu0 %98
  %v100 = vsel %vm72, %v49, 0.0
  %101 = vadd.xlane.f32.xlu0 %v100
  %v102 = vpop.xlane.xlu0 %101
  %v103 = vsel %vm72, %v50, 0.0
  %104 = vadd.xlane.f32.xlu0 %v103
  %v105 = vpop.xlane.xlu0 %104
  %v106 = vsel %vm72, %v51, 0.0
  %107 = vadd.xlane.f32.xlu0 %v106
  %v108 = vpop.xlane.xlu0 %107
  %v109 = vsel %vm72, %v52, 0.0
  %110 = vadd.xlane.f32.xlu0 %v109
  %v111 = vpop.xlane.xlu0 %110
  %v112 = vsel %vm72, %v53, 0.0
  %113 = vadd.xlane.f32.xlu0 %v112
  %v114 = vpop.xlane.xlu0 %113
  %v115 = vsel %vm72, %v54, 0.0
  %116 = vadd.xlane.f32.xlu0 %v115
  %v117 = vpop.xlane.xlu0 %116
  %v118 = vsel %vm72, %v55, 0.0
  %119 = vadd.xlane.f32.xlu0 %v118
  %v120 = vpop.xlane.xlu0 %119
  %v121 = vsel %vm72, %v56, 0.0
  %122 = vadd.xlane.f32.xlu0 %v121
  %v123 = vpop.xlane.xlu0 %122
  %v124 = vsel %vm72, %v57, 0.0
  %125 = vadd.xlane.f32.xlu0 %v124
  %v126 = vpop.xlane.xlu0 %125
  %v127 = vsel %vm72, %v58, 0.0
  %128 = vadd.xlane.f32.xlu0 %v127
  %v129 = vpop.xlane.xlu0 %128
  %v130 = vsel %vm72, %v59, 0.0
  %131 = vadd.xlane.f32.xlu0 %v130
  %v132 = vpop.xlane.xlu0 %131
  %v133 = vsel %vm72, %v60, 0.0
  %134 = vadd.xlane.f32.xlu0 %v133
  %v135 = vpop.xlane.xlu0 %134
  %v136 = vsel %vm72, %v61, 0.0
  %137 = vadd.xlane.f32.xlu0 %v136
  %v138 = vpop.xlane.xlu0 %137
  %v139 = vsel %vm72, %v62, 0.0
  %140 = vadd.xlane.f32.xlu0 %v139
  %v141 = vpop.xlane.xlu0 %140
  %v142 = vsel %vm72, %v63, 0.0
  %143 = vadd.xlane.f32.xlu0 %v142
  %v144 = vpop.xlane.xlu0 %143
  %v145 = vsel %vm72, %v64, 0.0
  %146 = vadd.xlane.f32.xlu0 %v145
  %v147 = vpop.xlane.xlu0 %146
  %v148 = vsel %vm72, %v65, 0.0
  %149 = vadd.xlane.f32.xlu0 %v148
  %v150 = vpop.xlane.xlu0 %149
  %v151 = vsel %vm72, %v66, 0.0
  %152 = vadd.xlane.f32.xlu0 %v151
  %v153 = vpop.xlane.xlu0 %152
  %v154 = vsel %vm72, %v67, 0.0
  %155 = vadd.xlane.f32.xlu0 %v154
  %v156 = vpop.xlane.xlu0 %155
  %v157 = vsel %vm72, %v68, 0.0
  %158 = vadd.xlane.f32.xlu0 %v157
  %v159 = vpop.xlane.xlu0 %158
  %v160 = vsel %vm72, %v69, 0.0
  %161 = vadd.xlane.f32.xlu0 %v160
  %v162 = vpop.xlane.xlu0 %161
  %v163 = vsel %vm72, %v70, 0.0
  %164 = vadd.xlane.f32.xlu0 %v163
  %v165 = vpop.xlane.xlu0 %164
  %v166 = vsel %vm72, %v71, 0.0
  %167 = vadd.xlane.f32.xlu0 %v166
  %v168 = vpop.xlane.xlu0 %167
  %v169 = vmax.f32 %v75, 1e-24
  %v170 = vmax.f32 %v78, 1e-24
  %v171 = vmax.f32 %v81, 1e-24
  %v172 = vmax.f32 %v84, 1e-24
  %v173 = vmax.f32 %v87, 1e-24
  %v174 = vmax.f32 %v90, 1e-24
  %v175 = vmax.f32 %v93, 1e-24
  %v176 = vmax.f32 %v96, 1e-24
  %v177 = vmax.f32 %v99, 1e-24
  %v178 = vmax.f32 %v102, 1e-24
  %v179 = vmax.f32 %v105, 1e-24
  %v180 = vmax.f32 %v108, 1e-24
  %v181 = vmax.f32 %v111, 1e-24
  %v182 = vmax.f32 %v114, 1e-24
  %v183 = vmax.f32 %v117, 1e-24
  %v184 = vmax.f32 %v120, 1e-24
  %v185 = vmax.f32 %v123, 1e-24
  %v186 = vmax.f32 %v126, 1e-24
  %v187 = vmax.f32 %v129, 1e-24
  %v188 = vmax.f32 %v132, 1e-24
  %v189 = vmax.f32 %v135, 1e-24
  %v190 = vmax.f32 %v138, 1e-24
  %v191 = vmax.f32 %v141, 1e-24
  %v192 = vmax.f32 %v144, 1e-24
  %v193 = vmax.f32 %v147, 1e-24
  %v194 = vmax.f32 %v150, 1e-24
  %v195 = vmax.f32 %v153, 1e-24
  %v196 = vmax.f32 %v156, 1e-24
  %v197 = vmax.f32 %v159, 1e-24
  %v198 = vmax.f32 %v162, 1e-24
  %v199 = vmax.f32 %v165, 1e-24
  %v200 = vmax.f32 %v168, 1e-24
  %v201 = vrsqrt.pop %v169
  %v202 = vrsqrt.pop %v170
  %v203 = vrsqrt.pop %v171
  %v204 = vrsqrt.pop %v172
  %v205 = vrsqrt.pop %v173
  %v206 = vrsqrt.pop %v174
  %v207 = vrsqrt.pop %v175
  %v208 = vrsqrt.pop %v176
  %v209 = vrsqrt.pop %v177
  %v210 = vrsqrt.pop %v178
  %v211 = vrsqrt.pop %v179
  %v212 = vrsqrt.pop %v180
  %v213 = vrsqrt.pop %v181
  %v214 = vrsqrt.pop %v182
  %v215 = vrsqrt.pop %v183
  %v216 = vrsqrt.pop %v184
  %v217 = vrsqrt.pop %v185
  %v218 = vrsqrt.pop %v186
  %v219 = vrsqrt.pop %v187
  %v220 = vrsqrt.pop %v188
  %v221 = vrsqrt.pop %v189
  %v222 = vrsqrt.pop %v190
  %v223 = vrsqrt.pop %v191
  %v224 = vrsqrt.pop %v192
  %v225 = vrsqrt.pop %v193
  %v226 = vrsqrt.pop %v194
  %v227 = vrsqrt.pop %v195
  %v228 = vrsqrt.pop %v196
  %v229 = vrsqrt.pop %v197
  %v230 = vrsqrt.pop %v198
  %v231 = vrsqrt.pop %v199
  %v232 = vrsqrt.pop %v200
  %v233 = vmul.f32 %v8, %v201
  %v234 = vmul.f32 %v9, %v202
  %v235 = vmul.f32 %v10, %v203
  %v236 = vmul.f32 %v11, %v204
  %v237 = vmul.f32 %v12, %v205
  %v238 = vmul.f32 %v13, %v206
  %v239 = vmul.f32 %v14, %v207
  %v240 = vmul.f32 %v15, %v208
  %v241 = vmul.f32 %v16, %v209
  %v242 = vmul.f32 %v17, %v210
  %v243 = vmul.f32 %v18, %v211
  %v244 = vmul.f32 %v19, %v212
  %v245 = vmul.f32 %v20, %v213
  %v246 = vmul.f32 %v21, %v214
  %v247 = vmul.f32 %v22, %v215
  %v248 = vmul.f32 %v23, %v216
  %v249 = vmul.f32 %v24, %v217
  %v250 = vmul.f32 %v25, %v218
  %v251 = vmul.f32 %v26, %v219
  %v252 = vmul.f32 %v27, %v220
  %v253 = vmul.f32 %v28, %v221
  %v254 = vmul.f32 %v29, %v222
  %v255 = vmul.f32 %v30, %v223
  %v256 = vmul.f32 %v31, %v224
  %v257 = vmul.f32 %v32, %v225
  %v258 = vmul.f32 %v33, %v226
  %v259 = vmul.f32 %v34, %v227
  %v260 = vmul.f32 %v35, %v228
  %v261 = vmul.f32 %v36, %v229
  %v262 = vmul.f32 %v37, %v230
  %v263 = vmul.f32 %v38, %v231
  %v264 = vmul.f32 %v39, %v232
  %265 = vst.msk [vmem:[%s1] sm:$0xff] %vm72, %v233
  %266 = vst.msk [vmem:[%s1 + $0x8] sm:$0xff] %vm72, %v234
  %267 = vst.msk [vmem:[%s1 + $0x10] sm:$0xff] %vm72, %v235
  %268 = vst.msk [vmem:[%s1 + $0x18] sm:$0xff] %vm72, %v236
  %269 = vst.msk [vmem:[%s1 + $0x20] sm:$0xff] %vm72, %v237
  %270 = vst.msk [vmem:[%s1 + $0x28] sm:$0xff] %vm72, %v238
  %271 = vst.msk [vmem:[%s1 + $0x30] sm:$0xff] %vm72, %v239
  %272 = vst.msk [vmem:[%s1 + $0x38] sm:$0xff] %vm72, %v240
  %273 = vst.msk [vmem:[%s1 + $0x40] sm:$0xff] %vm72, %v241
  %274 = vst.msk [vmem:[%s1 + $0x48] sm:$0xff] %vm72, %v242
  %275 = vst.msk [vmem:[%s1 + $0x50] sm:$0xff] %vm72, %v243
  %276 = vst.msk [vmem:[%s1 + $0x58] sm:$0xff] %vm72, %v244
  %277 = vst.msk [vmem:[%s1 + $0x60] sm:$0xff] %vm72, %v245
  %278 = vst.msk [vmem:[%s1 + $0x68] sm:$0xff] %vm72, %v246
  %279 = vst.msk [vmem:[%s1 + $0x70] sm:$0xff] %vm72, %v247
  %280 = vst.msk [vmem:[%s1 + $0x78] sm:$0xff] %vm72, %v248
  %281 = vst.msk [vmem:[%s1 + $0x80] sm:$0xff] %vm72, %v249
  %282 = vst.msk [vmem:[%s1 + $0x88] sm:$0xff] %vm72, %v250
  %283 = vst.msk [vmem:[%s1 + $0x90] sm:$0xff] %vm72, %v251
  %284 = vst.msk [vmem:[%s1 + $0x98] sm:$0xff] %vm72, %v252
  %285 = vst.msk [vmem:[%s1 + $0xa0] sm:$0xff] %vm72, %v253
  %286 = vst.msk [vmem:[%s1 + $0xa8] sm:$0xff] %vm72, %v254
  %287 = vst.msk [vmem:[%s1 + $0xb0] sm:$0xff] %vm72, %v255
  %288 = vst.msk [vmem:[%s1 + $0xb8] sm:$0xff] %vm72, %v256
  %289 = vst.msk [vmem:[%s1 + $0xc0] sm:$0xff] %vm72, %v257
  %290 = vst.msk [vmem:[%s1 + $0xc8] sm:$0xff] %vm72, %v258
  %291 = vst.msk [vmem:[%s1 + $0xd0] sm:$0xff] %vm72, %v259
  %292 = vst.msk [vmem:[%s1 + $0xd8] sm:$0xff] %vm72, %v260
  %293 = vst.msk [vmem:[%s1 + $0xe0] sm:$0xff] %vm72, %v261
  %294 = vst.msk [vmem:[%s1 + $0xe8] sm:$0xff] %vm72, %v262
  %295 = vst.msk [vmem:[%s1 + $0xf0] sm:$0xff] %vm72, %v263
  %296 = vst.msk [vmem:[%s1 + $0xf8] sm:$0xff] %vm72, %v264
  // Predicated region
  $region6: #{tpu_custom_call.1} parent=0 // pred_check
    _
  $region7: #{tpu_custom_call.1} parent=0 // pred_check_branch
    %298 = sbr.rel (0) target = $region9
  $region8: #{tpu_custom_call.1} parent=0 // pred_region
    _
  $region9: #{tpu_custom_call.1} parent=0 // pred_fallthru
    _
  // Predicated region
  $region10: #{tpu_custom_call.1} parent=0 // pred_check
    _
  $region11: #{tpu_custom_call.1} parent=0 // pred_check_branch
    %300 = sbr.rel (0) target = $region13
  $region12: #{tpu_custom_call.1} parent=0 // pred_region
    _
  $region13: #{tpu_custom_call.1} parent=0 // pred_fallthru
    _

</llo_original>
